<compile_context>
chip_gen: v6e
topology: v6e:2x2x1
jax: 0.10.0
libtpu: 0.0.40
codegen_flags: <defaults>
</compile_context>

<pallas_src>
import jax
import jax.numpy as jnp
from jax import lax
from jax.experimental import pallas as pl
from jax.experimental.pallas import tpu as pltpu

L = 64            # sequence length (Linear(64, 2) => 1 channel * 64 length)
NUM_CLASSES = 2


def net_kernel(x_ref,
               w1k0_ref, w1k1_ref, w1k2_ref, b1_ref,
               w2k0_ref, w2k1_ref, w2k2_ref, b2_ref,
               w3k0_ref, w3k1_ref, w3k2_ref, b3_ref,
               fcw_ref, fcb_ref, seg_ref, ml_ref, mr_ref,
               out_ref):
    a0 = x_ref[...]          # (1, N), N = Bblk*64, column index = b*64 + l
    ml = ml_ref[...]         # (1, N) float mask: 0.0 where l == 0 else 1.0
    mr = mr_ref[...]         # (1, N) float mask: 0.0 where l == L-1 else 1.0

    def shifted(a):
        # Values at l-1 / l+1 within each 64-wide sample segment (zero padded
        # at segment edges).  One lane-axis concat per direction per layer.
        cin, n = a.shape
        z = jnp.zeros((cin, 1), jnp.float32)
        left = jnp.concatenate([z, a[:, : n - 1]], axis=1) * ml     # x[l-1]
        right = jnp.concatenate([a[:, 1:], z], axis=1) * mr         # x[l+1]
        return left, right

    def conv_mxu(a, wk0, wk1, wk2, b):
        # y = W[:,:,0] @ x[l-1] + W[:,:,1] @ x[l] + W[:,:,2] @ x[l+1] + b
        left, right = shifted(a)
        return (jnp.dot(wk0, left, preferred_element_type=jnp.float32)
                + jnp.dot(wk1, a, preferred_element_type=jnp.float32)
                + jnp.dot(wk2, right, preferred_element_type=jnp.float32)
                + b)

    # conv1: Cin = 1 -> broadcasted VPU multiply-adds instead of K=1 matmuls.
    left0, right0 = shifted(a0)
    a1 = (w1k0_ref[...] * left0 + w1k1_ref[...] * a0
          + w1k2_ref[...] * right0 + b1_ref[...])                    # (8,  N)
    a2 = conv_mxu(a1, w2k0_ref[...], w2k1_ref[...], w2k2_ref[...], b2_ref[...])   # (16, N)
    a3 = conv_mxu(a2, w3k0_ref[...], w3k1_ref[...], w3k2_ref[...], b3_ref[...])   # (1,  N)

    # Linear(64, 2):  logits^T[c, b] = sum_l a3[0, b*64+l] * fcw[c, l] + fcb[c]
    # fcw_ref is fcw tiled along lanes; seg_ref is the (N, Bblk) segment one-hot.
    p = a3 * fcw_ref[...]                                            # (2, N)
    out_ref[...] = (jnp.dot(p, seg_ref[...], preferred_element_type=jnp.float32)
                    + fcb_ref[...])                                  # (2, Bblk)


def net_forward(x, params):
    """x: (B, 1, 64) float32 (PyTorch NCW). Returns (B, 2) logits."""
    B = x.shape[0]
    assert x.shape[1:] == (1, L)

    # Batch blocking: one block for small B; 128-sample blocks (parallel grid,
    # shards across TensorCores on v7x) once B is large.  Block sizes stay far
    # below v7x's 64 MiB VMEM.
    bblk = B if B <= 512 else 128
    bpad = pl.cdiv(B, bblk) * bblk
    if bpad != B:
        x = jnp.concatenate([x, jnp.zeros((bpad - B, 1, L), x.dtype)], axis=0)
    nblk = bblk * L

    # Lane-dense input slab: (1, B*64), column = b*64 + l (row-major reshape).
    xf = x.astype(jnp.float32).reshape(1, bpad * L)

    def taps(w):   # PyTorch Conv1d weight (Cout, Cin, 3) -> three (Cout, Cin) taps
        return [w[:, :, k].astype(jnp.float32) for k in range(3)]

    w1 = taps(params["w1"])          # each (8, 1)
    w2 = taps(params["w2"])          # each (16, 8)
    w3 = taps(params["w3"])          # each (1, 16)
    b1 = params["b1"].astype(jnp.float32).reshape(-1, 1)
    b2 = params["b2"].astype(jnp.float32).reshape(-1, 1)
    b3 = params["b3"].astype(jnp.float32).reshape(-1, 1)

    fcw_rep = jnp.tile(params["fcw"].astype(jnp.float32), (1, bblk))    # (2, nblk)
    fcb = params["fcb"].astype(jnp.float32).reshape(-1, 1)              # (2, 1)
    # Segment one-hot: seg[b*64+l, b] = 1  -> segmented lane reduction as one matmul.
    seg = jnp.repeat(jnp.eye(bblk, dtype=jnp.float32), L, axis=0)       # (nblk, bblk)

    pos = jnp.arange(nblk, dtype=jnp.int32) % L
    ml = (pos != 0).astype(jnp.float32).reshape(1, nblk)
    mr = (pos != L - 1).astype(jnp.float32).reshape(1, nblk)

    consts = [*w1, b1, *w2, b2, *w3, b3, fcw_rep, fcb, seg, ml, mr]

    grid = (bpad // bblk,)
    in_specs = [pl.BlockSpec((1, nblk), lambda i: (0, i))]
    # Weights / masks: constant index_map -> DMA'd once, resident across grid steps.
    in_specs += [pl.BlockSpec(c.shape, lambda i: (0, 0)) for c in consts]
    out_spec = pl.BlockSpec((NUM_CLASSES, bblk), lambda i: (0, i))

    logits_t = pl.pallas_call(
        net_kernel,
        out_shape=jax.ShapeDtypeStruct((NUM_CLASSES, bpad), jnp.float32),
        grid=grid,
        in_specs=in_specs,
        out_specs=out_spec,
        compiler_params=pltpu.CompilerParams(
            dimension_semantics=("parallel",),
            vmem_limit_bytes=32 * 1024 * 1024),
    )(xf, *consts)

    return jnp.transpose(logits_t)[:B]            # (B, 2)


def reference_forward(x, params):
    """Independent reference using lax.conv_general_dilated (NCW / OIW)."""
    dn = lax.conv_dimension_numbers(x.shape, params["w1"].shape, ("NCH", "OIH", "NCH"))

    def conv(a, w, b):
        y = lax.conv_general_dilated(a, w, window_strides=(1,), padding=[(1, 1)],
                                     dimension_numbers=dn)
        return y + b.reshape(1, -1, 1)

    a = conv(x, params["w1"], params["b1"])
    a = conv(a, params["w2"], params["b2"])
    a = conv(a, params["w3"], params["b3"])
    flat = a.reshape(a.shape[0], -1)
    return flat @ jnp.transpose(params["fcw"]) + params["fcb"][None, :]


def init_params(key):
    ks = jax.random.split(key, 8)
    scale = 0.1
    return {
        "w1": scale * jax.random.normal(ks[0], (8, 1, 3), jnp.float32),
        "b1": scale * jax.random.normal(ks[1], (8,), jnp.float32),
        "w2": scale * jax.random.normal(ks[2], (16, 8, 3), jnp.float32),
        "b2": scale * jax.random.normal(ks[3], (16,), jnp.float32),
        "w3": scale * jax.random.normal(ks[4], (1, 16, 3), jnp.float32),
        "b3": scale * jax.random.normal(ks[5], (1,), jnp.float32),
        "fcw": scale * jax.random.normal(ks[6], (2, 64), jnp.float32),  # PyTorch Linear layout (out, in)
        "fcb": scale * jax.random.normal(ks[7], (2,), jnp.float32),
    }


if __name__ == "__main__":
    key = jax.random.PRNGKey(0)
    pkey, xkey = jax.random.split(key)
    params = init_params(pkey)

    B = 2
    x = jax.random.normal(xkey, (B, 1, L), jnp.float32)   # NCL, like PyTorch NCW

    out = net_forward(x, params)
    out = jax.block_until_ready(out)

    ref = reference_forward(x, params)
    assert out.shape == (B, NUM_CLASSES)
    assert jnp.allclose(out, ref, atol=1e-4, rtol=1e-4), (out, ref)

    print("KERNEL_OK")
</pallas_src>

<mosaic_0001>
module attributes {stable_mosaic.version = 11 : i64} {
  func.func @net_kernel(%arg0: i32, %arg1: memref<1x128xf32, #tpu.memory_space<vmem>>, %arg2: memref<8x1xf32, #tpu.memory_space<vmem>>, %arg3: memref<8x1xf32, #tpu.memory_space<vmem>>, %arg4: memref<8x1xf32, #tpu.memory_space<vmem>>, %arg5: memref<8x1xf32, #tpu.memory_space<vmem>>, %arg6: memref<16x8xf32, #tpu.memory_space<vmem>>, %arg7: memref<16x8xf32, #tpu.memory_space<vmem>>, %arg8: memref<16x8xf32, #tpu.memory_space<vmem>>, %arg9: memref<16x1xf32, #tpu.memory_space<vmem>>, %arg10: memref<1x16xf32, #tpu.memory_space<vmem>>, %arg11: memref<1x16xf32, #tpu.memory_space<vmem>>, %arg12: memref<1x16xf32, #tpu.memory_space<vmem>>, %arg13: memref<1x1xf32, #tpu.memory_space<vmem>>, %arg14: memref<2x128xf32, #tpu.memory_space<vmem>>, %arg15: memref<2x1xf32, #tpu.memory_space<vmem>>, %arg16: memref<128x2xf32, #tpu.memory_space<vmem>>, %arg17: memref<1x128xf32, #tpu.memory_space<vmem>>, %arg18: memref<1x128xf32, #tpu.memory_space<vmem>>, %arg19: memref<2x2xf32, #tpu.memory_space<vmem>>) attributes {dimension_semantics = [#tpu.dimension_semantics<parallel>], iteration_bounds = array<i64: 1>, scalar_prefetch = 0 : i64, scratch_operands = 0 : i64, tpu.core_type = #tpu.core_type<tc>, window_params = [{transform_indices = @transform_0, window_bounds = array<i64: 1, 128>}, {pipeline_mode = #tpu.pipeline_mode<synchronous>, transform_indices = @transform_1, window_bounds = array<i64: 8, 1>}, {pipeline_mode = #tpu.pipeline_mode<synchronous>, transform_indices = @transform_2, window_bounds = array<i64: 8, 1>}, {pipeline_mode = #tpu.pipeline_mode<synchronous>, transform_indices = @transform_3, window_bounds = array<i64: 8, 1>}, {pipeline_mode = #tpu.pipeline_mode<synchronous>, transform_indices = @transform_4, window_bounds = array<i64: 8, 1>}, {pipeline_mode = #tpu.pipeline_mode<synchronous>, transform_indices = @transform_5, window_bounds = array<i64: 16, 8>}, {pipeline_mode = #tpu.pipeline_mode<synchronous>, transform_indices = @transform_6, window_bounds = array<i64: 16, 8>}, {pipeline_mode = #tpu.pipeline_mode<synchronous>, transform_indices = @transform_7, window_bounds = array<i64: 16, 8>}, {pipeline_mode = #tpu.pipeline_mode<synchronous>, transform_indices = @transform_8, window_bounds = array<i64: 16, 1>}, {pipeline_mode = #tpu.pipeline_mode<synchronous>, transform_indices = @transform_9, window_bounds = array<i64: 1, 16>}, {pipeline_mode = #tpu.pipeline_mode<synchronous>, transform_indices = @transform_10, window_bounds = array<i64: 1, 16>}, {pipeline_mode = #tpu.pipeline_mode<synchronous>, transform_indices = @transform_11, window_bounds = array<i64: 1, 16>}, {pipeline_mode = #tpu.pipeline_mode<synchronous>, transform_indices = @transform_12, window_bounds = array<i64: 1, 1>}, {pipeline_mode = #tpu.pipeline_mode<synchronous>, transform_indices = @transform_13, window_bounds = array<i64: 2, 128>}, {pipeline_mode = #tpu.pipeline_mode<synchronous>, transform_indices = @transform_14, window_bounds = array<i64: 2, 1>}, {pipeline_mode = #tpu.pipeline_mode<synchronous>, transform_indices = @transform_15, window_bounds = array<i64: 128, 2>}, {pipeline_mode = #tpu.pipeline_mode<synchronous>, transform_indices = @transform_16, window_bounds = array<i64: 1, 128>}, {pipeline_mode = #tpu.pipeline_mode<synchronous>, transform_indices = @transform_17, window_bounds = array<i64: 1, 128>}, {transform_indices = @transform_18, window_bounds = array<i64: 2, 2>}]} {
    %c0 = arith.constant 0 : index
    %c0_0 = arith.constant 0 : index
    %0 = vector.load %arg1[%c0, %c0_0] : memref<1x128xf32, #tpu.memory_space<vmem>>, vector<1x128xf32>
    %c0_1 = arith.constant 0 : index
    %c0_2 = arith.constant 0 : index
    %1 = vector.load %arg17[%c0_1, %c0_2] : memref<1x128xf32, #tpu.memory_space<vmem>>, vector<1x128xf32>
    %c0_3 = arith.constant 0 : index
    %c0_4 = arith.constant 0 : index
    %2 = vector.load %arg18[%c0_3, %c0_4] : memref<1x128xf32, #tpu.memory_space<vmem>>, vector<1x128xf32>
    %cst = arith.constant 0.000000e+00 : f32
    %3 = vector.broadcast %cst : f32 to vector<1x1xf32>
    %4 = vector.extract_strided_slice %0 {offsets = [0, 0], sizes = [1, 127], strides = [1, 1]} : vector<1x128xf32> to vector<1x127xf32>
    %5 = tpu.concatenate %3, %4 in 1 : vector<1x1xf32>, vector<1x127xf32> -> vector<1x128xf32>
    %6 = arith.mulf %5, %1 : vector<1x128xf32>
    %7 = vector.extract_strided_slice %0 {offsets = [0, 1], sizes = [1, 127], strides = [1, 1]} : vector<1x128xf32> to vector<1x127xf32>
    %8 = tpu.concatenate %7, %3 in 1 : vector<1x127xf32>, vector<1x1xf32> -> vector<1x128xf32>
    %9 = arith.mulf %8, %2 : vector<1x128xf32>
    %c0_5 = arith.constant 0 : index
    %c0_6 = arith.constant 0 : index
    %10 = vector.load %arg2[%c0_5, %c0_6] : memref<8x1xf32, #tpu.memory_space<vmem>>, vector<8x1xf32>
    %11 = vector.broadcast %10 : vector<8x1xf32> to vector<8x128xf32>
    %12 = vector.broadcast %6 : vector<1x128xf32> to vector<8x128xf32>
    %13 = arith.mulf %11, %12 : vector<8x128xf32>
    %c0_7 = arith.constant 0 : index
    %c0_8 = arith.constant 0 : index
    %14 = vector.load %arg3[%c0_7, %c0_8] : memref<8x1xf32, #tpu.memory_space<vmem>>, vector<8x1xf32>
    %15 = vector.broadcast %14 : vector<8x1xf32> to vector<8x128xf32>
    %16 = vector.broadcast %0 : vector<1x128xf32> to vector<8x128xf32>
    %17 = arith.mulf %15, %16 : vector<8x128xf32>
    %18 = arith.addf %13, %17 : vector<8x128xf32>
    %c0_9 = arith.constant 0 : index
    %c0_10 = arith.constant 0 : index
    %19 = vector.load %arg4[%c0_9, %c0_10] : memref<8x1xf32, #tpu.memory_space<vmem>>, vector<8x1xf32>
    %20 = vector.broadcast %19 : vector<8x1xf32> to vector<8x128xf32>
    %21 = vector.broadcast %9 : vector<1x128xf32> to vector<8x128xf32>
    %22 = arith.mulf %20, %21 : vector<8x128xf32>
    %23 = arith.addf %18, %22 : vector<8x128xf32>
    %c0_11 = arith.constant 0 : index
    %c0_12 = arith.constant 0 : index
    %24 = vector.load %arg5[%c0_11, %c0_12] : memref<8x1xf32, #tpu.memory_space<vmem>>, vector<8x1xf32>
    %25 = vector.broadcast %24 : vector<8x1xf32> to vector<8x128xf32>
    %26 = arith.addf %23, %25 : vector<8x128xf32>
    %c0_13 = arith.constant 0 : index
    %c0_14 = arith.constant 0 : index
    %27 = vector.load %arg6[%c0_13, %c0_14] : memref<16x8xf32, #tpu.memory_space<vmem>>, vector<16x8xf32>
    %c0_15 = arith.constant 0 : index
    %c0_16 = arith.constant 0 : index
    %28 = vector.load %arg7[%c0_15, %c0_16] : memref<16x8xf32, #tpu.memory_space<vmem>>, vector<16x8xf32>
    %c0_17 = arith.constant 0 : index
    %c0_18 = arith.constant 0 : index
    %29 = vector.load %arg8[%c0_17, %c0_18] : memref<16x8xf32, #tpu.memory_space<vmem>>, vector<16x8xf32>
    %c0_19 = arith.constant 0 : index
    %c0_20 = arith.constant 0 : index
    %30 = vector.load %arg9[%c0_19, %c0_20] : memref<16x1xf32, #tpu.memory_space<vmem>>, vector<16x1xf32>
    %cst_21 = arith.constant 0.000000e+00 : f32
    %31 = vector.broadcast %cst_21 : f32 to vector<8x1xf32>
    %32 = vector.extract_strided_slice %26 {offsets = [0, 0], sizes = [8, 127], strides = [1, 1]} : vector<8x128xf32> to vector<8x127xf32>
    %33 = tpu.concatenate %31, %32 in 1 : vector<8x1xf32>, vector<8x127xf32> -> vector<8x128xf32>
    %34 = vector.broadcast %1 : vector<1x128xf32> to vector<8x128xf32>
    %35 = arith.mulf %33, %34 : vector<8x128xf32>
    %36 = vector.extract_strided_slice %26 {offsets = [0, 1], sizes = [8, 127], strides = [1, 1]} : vector<8x128xf32> to vector<8x127xf32>
    %37 = tpu.concatenate %36, %31 in 1 : vector<8x127xf32>, vector<8x1xf32> -> vector<8x128xf32>
    %38 = vector.broadcast %2 : vector<1x128xf32> to vector<8x128xf32>
    %39 = arith.mulf %37, %38 : vector<8x128xf32>
    %cst_22 = arith.constant dense<0.000000e+00> : vector<16x128xf32>
    %40 = tpu.matmul %27, %35, %cst_22 {dimension_numbers = #tpu.dot_dimension_numbers<[1], [0], [0], [1], [0, 0, 1, 1], [], []>} : vector<16x8xf32>, vector<8x128xf32>, vector<16x128xf32> -> vector<16x128xf32>
    %cst_23 = arith.constant dense<0.000000e+00> : vector<16x128xf32>
    %41 = tpu.matmul %28, %26, %cst_23 {dimension_numbers = #tpu.dot_dimension_numbers<[1], [0], [0], [1], [0, 0, 1, 1], [], []>} : vector<16x8xf32>, vector<8x128xf32>, vector<16x128xf32> -> vector<16x128xf32>
    %42 = arith.addf %40, %41 : vector<16x128xf32>
    %cst_24 = arith.constant dense<0.000000e+00> : vector<16x128xf32>
    %43 = tpu.matmul %29, %39, %cst_24 {dimension_numbers = #tpu.dot_dimension_numbers<[1], [0], [0], [1], [0, 0, 1, 1], [], []>} : vector<16x8xf32>, vector<8x128xf32>, vector<16x128xf32> -> vector<16x128xf32>
    %44 = arith.addf %42, %43 : vector<16x128xf32>
    %45 = vector.broadcast %30 : vector<16x1xf32> to vector<16x128xf32>
    %46 = arith.addf %44, %45 : vector<16x128xf32>
    %c0_25 = arith.constant 0 : index
    %c0_26 = arith.constant 0 : index
    %47 = vector.load %arg10[%c0_25, %c0_26] : memref<1x16xf32, #tpu.memory_space<vmem>>, vector<1x16xf32>
    %c0_27 = arith.constant 0 : index
    %c0_28 = arith.constant 0 : index
    %48 = vector.load %arg11[%c0_27, %c0_28] : memref<1x16xf32, #tpu.memory_space<vmem>>, vector<1x16xf32>
    %c0_29 = arith.constant 0 : index
    %c0_30 = arith.constant 0 : index
    %49 = vector.load %arg12[%c0_29, %c0_30] : memref<1x16xf32, #tpu.memory_space<vmem>>, vector<1x16xf32>
    %c0_31 = arith.constant 0 : index
    %c0_32 = arith.constant 0 : index
    %50 = vector.load %arg13[%c0_31, %c0_32] : memref<1x1xf32, #tpu.memory_space<vmem>>, vector<1x1xf32>
    %cst_33 = arith.constant 0.000000e+00 : f32
    %51 = vector.broadcast %cst_33 : f32 to vector<16x1xf32>
    %52 = vector.extract_strided_slice %46 {offsets = [0, 0], sizes = [16, 127], strides = [1, 1]} : vector<16x128xf32> to vector<16x127xf32>
    %53 = tpu.concatenate %51, %52 in 1 : vector<16x1xf32>, vector<16x127xf32> -> vector<16x128xf32>
    %54 = vector.broadcast %1 : vector<1x128xf32> to vector<16x128xf32>
    %55 = arith.mulf %53, %54 : vector<16x128xf32>
    %56 = vector.extract_strided_slice %46 {offsets = [0, 1], sizes = [16, 127], strides = [1, 1]} : vector<16x128xf32> to vector<16x127xf32>
    %57 = tpu.concatenate %56, %51 in 1 : vector<16x127xf32>, vector<16x1xf32> -> vector<16x128xf32>
    %58 = vector.broadcast %2 : vector<1x128xf32> to vector<16x128xf32>
    %59 = arith.mulf %57, %58 : vector<16x128xf32>
    %cst_34 = arith.constant dense<0.000000e+00> : vector<1x128xf32>
    %60 = tpu.matmul %47, %55, %cst_34 {dimension_numbers = #tpu.dot_dimension_numbers<[1], [0], [0], [1], [0, 0, 1, 1], [], []>} : vector<1x16xf32>, vector<16x128xf32>, vector<1x128xf32> -> vector<1x128xf32>
    %cst_35 = arith.constant dense<0.000000e+00> : vector<1x128xf32>
    %61 = tpu.matmul %48, %46, %cst_35 {dimension_numbers = #tpu.dot_dimension_numbers<[1], [0], [0], [1], [0, 0, 1, 1], [], []>} : vector<1x16xf32>, vector<16x128xf32>, vector<1x128xf32> -> vector<1x128xf32>
    %62 = arith.addf %60, %61 : vector<1x128xf32>
    %cst_36 = arith.constant dense<0.000000e+00> : vector<1x128xf32>
    %63 = tpu.matmul %49, %59, %cst_36 {dimension_numbers = #tpu.dot_dimension_numbers<[1], [0], [0], [1], [0, 0, 1, 1], [], []>} : vector<1x16xf32>, vector<16x128xf32>, vector<1x128xf32> -> vector<1x128xf32>
    %64 = arith.addf %62, %63 : vector<1x128xf32>
    %65 = vector.broadcast %50 : vector<1x1xf32> to vector<1x128xf32>
    %66 = arith.addf %64, %65 : vector<1x128xf32>
    %c0_37 = arith.constant 0 : index
    %c0_38 = arith.constant 0 : index
    %67 = vector.load %arg14[%c0_37, %c0_38] : memref<2x128xf32, #tpu.memory_space<vmem>>, vector<2x128xf32>
    %68 = vector.broadcast %66 : vector<1x128xf32> to vector<2x128xf32>
    %69 = arith.mulf %68, %67 : vector<2x128xf32>
    %c0_39 = arith.constant 0 : index
    %c0_40 = arith.constant 0 : index
    %70 = vector.load %arg16[%c0_39, %c0_40] : memref<128x2xf32, #tpu.memory_space<vmem>>, vector<128x2xf32>
    %cst_41 = arith.constant dense<0.000000e+00> : vector<2x2xf32>
    %71 = tpu.matmul %69, %70, %cst_41 {dimension_numbers = #tpu.dot_dimension_numbers<[1], [0], [0], [1], [0, 0, 1, 1], [], []>} : vector<2x128xf32>, vector<128x2xf32>, vector<2x2xf32> -> vector<2x2xf32>
    %c0_42 = arith.constant 0 : index
    %c0_43 = arith.constant 0 : index
    %72 = vector.load %arg15[%c0_42, %c0_43] : memref<2x1xf32, #tpu.memory_space<vmem>>, vector<2x1xf32>
    %73 = vector.broadcast %72 : vector<2x1xf32> to vector<2x2xf32>
    %74 = arith.addf %71, %73 : vector<2x2xf32>
    %c0_44 = arith.constant 0 : index
    %c0_45 = arith.constant 0 : index
    %75 = vector.load %arg19[%c0_44, %c0_45] : memref<2x2xf32, #tpu.memory_space<vmem>>, vector<2x2xf32>
    tpu.vector_store %arg19[%c0_44, %c0_45], %74 {strides = array<i32>} : memref<2x2xf32, #tpu.memory_space<vmem>>, vector<2x2xf32>,
    return
  }
  func.func @transform_0(%arg0: i32) -> (i32, i32) {
    %c0_i32 = arith.constant 0 : i32
    %c0_i32_0 = arith.constant 0 : i32
    return %c0_i32, %arg0 : i32, i32
  }
  func.func @transform_1(%arg0: i32) -> (i32, i32) {
    %c0_i32 = arith.constant 0 : i32
    %c0_i32_0 = arith.constant 0 : i32
    %c0_i32_1 = arith.constant 0 : i32
    return %c0_i32, %c0_i32_0 : i32, i32
  }
  func.func @transform_2(%arg0: i32) -> (i32, i32) {
    %c0_i32 = arith.constant 0 : i32
    %c0_i32_0 = arith.constant 0 : i32
    %c0_i32_1 = arith.constant 0 : i32
    return %c0_i32, %c0_i32_0 : i32, i32
  }
  func.func @transform_3(%arg0: i32) -> (i32, i32) {
    %c0_i32 = arith.constant 0 : i32
    %c0_i32_0 = arith.constant 0 : i32
    %c0_i32_1 = arith.constant 0 : i32
    return %c0_i32, %c0_i32_0 : i32, i32
  }
  func.func @transform_4(%arg0: i32) -> (i32, i32) {
    %c0_i32 = arith.constant 0 : i32
    %c0_i32_0 = arith.constant 0 : i32
    %c0_i32_1 = arith.constant 0 : i32
    return %c0_i32, %c0_i32_0 : i32, i32
  }
  func.func @transform_5(%arg0: i32) -> (i32, i32) {
    %c0_i32 = arith.constant 0 : i32
    %c0_i32_0 = arith.constant 0 : i32
    %c0_i32_1 = arith.constant 0 : i32
    return %c0_i32, %c0_i32_0 : i32, i32
  }
  func.func @transform_6(%arg0: i32) -> (i32, i32) {
    %c0_i32 = arith.constant 0 : i32
    %c0_i32_0 = arith.constant 0 : i32
    %c0_i32_1 = arith.constant 0 : i32
    return %c0_i32, %c0_i32_0 : i32, i32
  }
  func.func @transform_7(%arg0: i32) -> (i32, i32) {
    %c0_i32 = arith.constant 0 : i32
    %c0_i32_0 = arith.constant 0 : i32
    %c0_i32_1 = arith.constant 0 : i32
    return %c0_i32, %c0_i32_0 : i32, i32
  }
  func.func @transform_8(%arg0: i32) -> (i32, i32) {
    %c0_i32 = arith.constant 0 : i32
    %c0_i32_0 = arith.constant 0 : i32
    %c0_i32_1 = arith.constant 0 : i32
    return %c0_i32, %c0_i32_0 : i32, i32
  }
  func.func @transform_9(%arg0: i32) -> (i32, i32) {
    %c0_i32 = arith.constant 0 : i32
    %c0_i32_0 = arith.constant 0 : i32
    %c0_i32_1 = arith.constant 0 : i32
    return %c0_i32, %c0_i32_0 : i32, i32
  }
  func.func @transform_10(%arg0: i32) -> (i32, i32) {
    %c0_i32 = arith.constant 0 : i32
    %c0_i32_0 = arith.constant 0 : i32
    %c0_i32_1 = arith.constant 0 : i32
    return %c0_i32, %c0_i32_0 : i32, i32
  }
  func.func @transform_11(%arg0: i32) -> (i32, i32) {
    %c0_i32 = arith.constant 0 : i32
    %c0_i32_0 = arith.constant 0 : i32
    %c0_i32_1 = arith.constant 0 : i32
    return %c0_i32, %c0_i32_0 : i32, i32
  }
  func.func @transform_12(%arg0: i32) -> (i32, i32) {
    %c0_i32 = arith.constant 0 : i32
    %c0_i32_0 = arith.constant 0 : i32
    %c0_i32_1 = arith.constant 0 : i32
    return %c0_i32, %c0_i32_0 : i32, i32
  }
  func.func @transform_13(%arg0: i32) -> (i32, i32) {
    %c0_i32 = arith.constant 0 : i32
    %c0_i32_0 = arith.constant 0 : i32
    %c0_i32_1 = arith.constant 0 : i32
    return %c0_i32, %c0_i32_0 : i32, i32
  }
  func.func @transform_14(%arg0: i32) -> (i32, i32) {
    %c0_i32 = arith.constant 0 : i32
    %c0_i32_0 = arith.constant 0 : i32
    %c0_i32_1 = arith.constant 0 : i32
    return %c0_i32, %c0_i32_0 : i32, i32
  }
  func.func @transform_15(%arg0: i32) -> (i32, i32) {
    %c0_i32 = arith.constant 0 : i32
    %c0_i32_0 = arith.constant 0 : i32
    %c0_i32_1 = arith.constant 0 : i32
    return %c0_i32, %c0_i32_0 : i32, i32
  }
  func.func @transform_16(%arg0: i32) -> (i32, i32) {
    %c0_i32 = arith.constant 0 : i32
    %c0_i32_0 = arith.constant 0 : i32
    %c0_i32_1 = arith.constant 0 : i32
    return %c0_i32, %c0_i32_0 : i32, i32
  }
  func.func @transform_17(%arg0: i32) -> (i32, i32) {
    %c0_i32 = arith.constant 0 : i32
    %c0_i32_0 = arith.constant 0 : i32
    %c0_i32_1 = arith.constant 0 : i32
    return %c0_i32, %c0_i32_0 : i32, i32
  }
  func.func @transform_18(%arg0: i32) -> (i32, i32) {
    %c0_i32 = arith.constant 0 : i32
    %c0_i32_0 = arith.constant 0 : i32
    return %c0_i32, %arg0 : i32, i32
  }
}

</mosaic_0001>

<llo_original>
// kernel: tpu_custom_call.1
$region0: #{tpu_custom_call.1}
  #allocation0 [shape = 'u32[]', space=smem, size = 0x4, offset = 0x4, fixed_abs, tag = 'smem constant byte address 0x4 - core index']
  #allocation1 [shape = 'u32[144,128]{1,0:T(1,128)}', space=vmem, size = 0x12000, scoped, tag = 'internal scratch']
  #allocation2 [shape = 'f32[1,1]{1,0:T(1,128)S(1)}', space=vmem, size = 0x200, scoped, tag = 'scoped memory for tpu_custom_call.1']
  %s0 = inlined_call_operand.vmem [shape: f32[1,128], index: 0, kind: input, shape index: {}]
  %s1 = inlined_call_operand.vmem [shape: f32[8,1], index: 1, kind: input, shape index: {}]
  %s2 = inlined_call_operand.vmem [shape: f32[8,1], index: 2, kind: input, shape index: {}]
  %s3 = inlined_call_operand.vmem [shape: f32[8,1], index: 3, kind: input, shape index: {}]
  %s4 = inlined_call_operand.vmem [shape: f32[8,1], index: 4, kind: input, shape index: {}]
  %s5 = inlined_call_operand.vmem [shape: f32[16,8], index: 5, kind: input, shape index: {}]
  %s6 = inlined_call_operand.vmem [shape: f32[16,8], index: 6, kind: input, shape index: {}]
  %s7 = inlined_call_operand.vmem [shape: f32[16,8], index: 7, kind: input, shape index: {}]
  %s8 = inlined_call_operand.vmem [shape: f32[16,1], index: 8, kind: input, shape index: {}]
  %s9 = inlined_call_operand.vmem [shape: f32[1,16], index: 9, kind: input, shape index: {}]
  %s10 = inlined_call_operand.vmem [shape: f32[1,16], index: 10, kind: input, shape index: {}]
  %s11 = inlined_call_operand.vmem [shape: f32[1,16], index: 11, kind: input, shape index: {}]
  %s12 = inlined_call_operand.<no memory space> [shape: f32[1,1], index: 12, kind: input, shape index: {}]
  %s13 = inlined_call_operand.vmem [shape: f32[2,128], index: 13, kind: input, shape index: {}]
  %s14 = inlined_call_operand.vmem [shape: f32[2,1], index: 14, kind: input, shape index: {}]
  %s15 = inlined_call_operand.vmem [shape: f32[128,2], index: 15, kind: input, shape index: {}]
  %s16 = inlined_call_operand.vmem [shape: f32[1,128], index: 16, kind: input, shape index: {}]
  %s17 = inlined_call_operand.vmem [shape: f32[1,128], index: 17, kind: input, shape index: {}]
  %s18 = inlined_call_operand.hbm [shape: f32[2,2], index: 18, kind: output, shape index: {}]
  %s19 = sld [smem:[#allocation0]]
  $region82: #{tpu_custom_call.1} parent=0
    _
  %s21 = ssub.s32 1, %s19
  %s22 = scalar_select 0, %s21, %s19
  %v23 = vstv %s12
  %24 = vst [vmem:[#allocation2] sm:$0x1] %v23
  $region1: #{tpu_custom_call.1} parent=0
    #allocation3 [shape = 'u8[1024]{0}', space=vmem, size = 0x400, scoped, tag = 'output window, operand 0, single buffered']
    #allocation4 [shape = 's32[1]{0}', space=sflag, size = 0x4, scoped, tag = 'scoped memory for tpu_custom_call.1']
    %25 = vsyncpa [#allocation4], 0
    // Predicated region
    $region2: #{tpu_custom_call.1} parent=1 // pred_check
      _
    $region3: #{tpu_custom_call.1} parent=1 // pred_check_branch
      %27 = sbr.rel (0) target = $region5
    $region4: #{tpu_custom_call.1} parent=1 // pred_region
      _
    $region5: #{tpu_custom_call.1} parent=1 // pred_fallthru
      _
    // Predicated region
    $region6: #{tpu_custom_call.1} parent=1 // pred_check
      _
    $region7: #{tpu_custom_call.1} parent=1 // pred_check_branch
      %29 = sbr.rel (0) target = $region9
    $region8: #{tpu_custom_call.1} parent=1 // pred_region
      _
    $region9: #{tpu_custom_call.1} parent=1 // pred_fallthru
      _
    // Predicated region
    $region10: #{tpu_custom_call.1} parent=1 // pred_check
      _
    $region11: #{tpu_custom_call.1} parent=1 // pred_check_branch
      %31 = sbr.rel (0) target = $region13
    $region12: #{tpu_custom_call.1} parent=1 // pred_region
      _
    $region13: #{tpu_custom_call.1} parent=1 // pred_fallthru
      _
    // Predicated region
    $region14: #{tpu_custom_call.1} parent=1 // pred_check
      _
    $region15: #{tpu_custom_call.1} parent=1 // pred_check_branch
      %33 = sbr.rel (0) target = $region17
    $region16: #{tpu_custom_call.1} parent=1 // pred_region
      _
    $region17: #{tpu_custom_call.1} parent=1 // pred_fallthru
      _
    // Predicated region
    $region18: #{tpu_custom_call.1} parent=1 // pred_check
      _
    $region19: #{tpu_custom_call.1} parent=1 // pred_check_branch
      %35 = sbr.rel (0) target = $region21
    $region20: #{tpu_custom_call.1} parent=1 // pred_region
      _
    $region21: #{tpu_custom_call.1} parent=1 // pred_fallthru
      _
    // Predicated region
    $region22: #{tpu_custom_call.1} parent=1 // pred_check
      _
    $region23: #{tpu_custom_call.1} parent=1 // pred_check_branch
      %37 = sbr.rel (0) target = $region25
    $region24: #{tpu_custom_call.1} parent=1 // pred_region
      _
    $region25: #{tpu_custom_call.1} parent=1 // pred_fallthru
      _
    // Predicated region
    $region26: #{tpu_custom_call.1} parent=1 // pred_check
      _
    $region27: #{tpu_custom_call.1} parent=1 // pred_check_branch
      %39 = sbr.rel (0) target = $region29
    $region28: #{tpu_custom_call.1} parent=1 // pred_region
      _
    $region29: #{tpu_custom_call.1} parent=1 // pred_fallthru
      _
    // Predicated region
    $region30: #{tpu_custom_call.1} parent=1 // pred_check
      _
    $region31: #{tpu_custom_call.1} parent=1 // pred_check_branch
      %41 = sbr.rel (0) target = $region33
    $region32: #{tpu_custom_call.1} parent=1 // pred_region
      _
    $region33: #{tpu_custom_call.1} parent=1 // pred_fallthru
      _
    // Predicated region
    $region34: #{tpu_custom_call.1} parent=1 // pred_check
      _
    $region35: #{tpu_custom_call.1} parent=1 // pred_check_branch
      %43 = sbr.rel (0) target = $region37
    $region36: #{tpu_custom_call.1} parent=1 // pred_region
      _
    $region37: #{tpu_custom_call.1} parent=1 // pred_fallthru
      _
    // Predicated region
    $region38: #{tpu_custom_call.1} parent=1 // pred_check
      _
    $region39: #{tpu_custom_call.1} parent=1 // pred_check_branch
      %45 = sbr.rel (0) target = $region41
    $region40: #{tpu_custom_call.1} parent=1 // pred_region
      _
    $region41: #{tpu_custom_call.1} parent=1 // pred_fallthru
      _
    // Predicated region
    $region42: #{tpu_custom_call.1} parent=1 // pred_check
      _
    $region43: #{tpu_custom_call.1} parent=1 // pred_check_branch
      %47 = sbr.rel (0) target = $region45
    $region44: #{tpu_custom_call.1} parent=1 // pred_region
      _
    $region45: #{tpu_custom_call.1} parent=1 // pred_fallthru
      _
    // Predicated region
    $region46: #{tpu_custom_call.1} parent=1 // pred_check
      _
    $region47: #{tpu_custom_call.1} parent=1 // pred_check_branch
      %49 = sbr.rel (0) target = $region49
    $region48: #{tpu_custom_call.1} parent=1 // pred_region
      _
    $region49: #{tpu_custom_call.1} parent=1 // pred_fallthru
      _
    // Predicated region
    $region50: #{tpu_custom_call.1} parent=1 // pred_check
      _
    $region51: #{tpu_custom_call.1} parent=1 // pred_check_branch
      %51 = sbr.rel (0) target = $region53
    $region52: #{tpu_custom_call.1} parent=1 // pred_region
      _
    $region53: #{tpu_custom_call.1} parent=1 // pred_fallthru
      _
    // Predicated region
    $region54: #{tpu_custom_call.1} parent=1 // pred_check
      _
    $region55: #{tpu_custom_call.1} parent=1 // pred_check_branch
      %53 = sbr.rel (0) target = $region57
    $region56: #{tpu_custom_call.1} parent=1 // pred_region
      _
    $region57: #{tpu_custom_call.1} parent=1 // pred_fallthru
      _
    // Predicated region
    $region58: #{tpu_custom_call.1} parent=1 // pred_check
      _
    $region59: #{tpu_custom_call.1} parent=1 // pred_check_branch
      %55 = sbr.rel (0) target = $region61
    $region60: #{tpu_custom_call.1} parent=1 // pred_region
      _
    $region61: #{tpu_custom_call.1} parent=1 // pred_fallthru
      _
    // Predicated region
    $region62: #{tpu_custom_call.1} parent=1 // pred_check
      _
    $region63: #{tpu_custom_call.1} parent=1 // pred_check_branch
      %57 = sbr.rel (0) target = $region65
    $region64: #{tpu_custom_call.1} parent=1 // pred_region
      _
    $region65: #{tpu_custom_call.1} parent=1 // pred_fallthru
      _
    // Predicated region
    $region66: #{tpu_custom_call.1} parent=1 // pred_check
      _
    $region67: #{tpu_custom_call.1} parent=1 // pred_check_branch
      %59 = sbr.rel (0) target = $region69
    $region68: #{tpu_custom_call.1} parent=1 // pred_region
      _
    $region69: #{tpu_custom_call.1} parent=1 // pred_fallthru
      _
    // Predicated region
    $region70: #{tpu_custom_call.1} parent=1 // pred_check
      _
    $region71: #{tpu_custom_call.1} parent=1 // pred_check_branch
      %61 = sbr.rel (0) target = $region73
    $region72: #{tpu_custom_call.1} parent=1 // pred_region
      _
    $region73: #{tpu_custom_call.1} parent=1 // pred_fallthru
      _
    %v62 = vld [vmem:[%s0] sm:$0x1]
    %v63 = vld [vmem:[%s16] sm:$0x1]
    %v64 = vld [vmem:[%s17] sm:$0x1]
    %v66 = vlaneseq
    %v67 = vshrl.u32 %v66, 7
    %v68 = vsub.s32 0, %v67
    %v69 = vrot.slane %v62, %v68
    %70 = vrot.lane.b32.xlu0 %v69, 1
    %v71 = vpop.permute.xlu0 %70
    %vm73 = vcmask 7168
    %v74 = vsel %vm73, 0.0, %v71
    %v75 = vmul.f32 %v74, %v63
    %76 = vrot.lane.b32.xlu0 %v69, 127
    %v77 = vpop.permute.xlu0 %76
    %vm79 = vcmask 1039360
    %v80 = vsel %vm79, %v77, 0.0
    %v81 = vmul.f32 %v80, %v64
    %v82 = vld [vmem:[%s1] sm:$0xff]
    %84 = vset.pattern.permute.xlu0 0
    %85 = vperm.xlu0 %84, %v82
    %v86 = vpop.permute.xlu0 %85
    %v88 = vlaneseq
    %v89 = vshrl.u32 %v88, 7
    %v90 = vsub.s32 0, %v89
    %v91 = vrot.slane %v75, %v90
    %v92 = vmul.f32 %v86, %v91
    %v93 = vld [vmem:[%s2] sm:$0xff]
    %95 = vset.pattern.permute.xlu0 0
    %96 = vperm.xlu0 %95, %v93
    %v97 = vpop.permute.xlu0 %96
    %v100 = vmul.f32 %v97, %v69
    %v101 = vadd.f32 %v92, %v100
    %v102 = vld [vmem:[%s3] sm:$0xff]
    %104 = vset.pattern.permute.xlu0 0
    %105 = vperm.xlu0 %104, %v102
    %v106 = vpop.permute.xlu0 %105
    %v108 = vlaneseq
    %v109 = vshrl.u32 %v108, 7
    %v110 = vsub.s32 0, %v109
    %v111 = vrot.slane %v81, %v110
    %v112 = vmul.f32 %v106, %v111
    %v113 = vadd.f32 %v101, %v112
    %v114 = vld [vmem:[%s4] sm:$0xff]
    %116 = vset.pattern.permute.xlu0 0
    %117 = vperm.xlu0 %116, %v114
    %v118 = vpop.permute.xlu0 %117
    %v120 = vadd.f32 %v113, %v118
    %v121 = vld [vmem:[%s5] sm:$0xff]
    %v122 = vld [vmem:[%s5 + $0x8] sm:$0xff]
    %v123 = vld [vmem:[%s6] sm:$0xff]
    %v124 = vld [vmem:[%s6 + $0x8] sm:$0xff]
    %v125 = vld [vmem:[%s7] sm:$0xff]
    %v126 = vld [vmem:[%s7 + $0x8] sm:$0xff]
    %v127 = vld [vmem:[%s8] sm:$0xff]
    %v128 = vld [vmem:[%s8 + $0x8] sm:$0xff]
    %130 = vrot.lane.b32.xlu0 %v120, 1
    %v131 = vpop.permute.xlu0 %130
    %v133 = vsel %vm73, 0.0, %v131
    %v135 = vlaneseq
    %v136 = vshrl.u32 %v135, 7
    %v137 = vsub.s32 0, %v136
    %v138 = vrot.slane %v63, %v137
    %v140 = vmul.f32 %v133, %v138
    %141 = vrot.lane.b32.xlu0 %v120, 127
    %v142 = vpop.permute.xlu0 %141
    %v144 = vsel %vm79, %v142, 0.0
    %v146 = vlaneseq
    %v147 = vshrl.u32 %v146, 7
    %v148 = vsub.s32 0, %v147
    %v149 = vrot.slane %v64, %v148
    %v151 = vmul.f32 %v144, %v149
    %vm152 = vcmask 64512
    %v154 = vsel %vm152, %v123, 0
    %v157 = vsel %vm152, %v124, 0
    %159 = vmatprep.subr.mxu0 0.0
    %160 = vmatpush1.msra.mxu0 0.0
    %161 = vmatprep.subr.mxu0 0.0
    %162 = vmatpush1.msra.mxu0 0.0
    %163 = vmatprep.subr.mxu0 0.0
    %164 = vmatpush1.msra.mxu0 0.0
    %165 = vmatprep.subr.mxu0 0.0
    %166 = vmatpush1.msra.mxu0 0.0
    %167 = vmatprep.subr.mxu0 0.0
    %168 = vmatpush1.msra.mxu0 0.0
    %169 = vmatprep.subr.mxu0 0.0
    %170 = vmatpush1.msra.mxu0 0.0
    %171 = vmatprep.subr.mxu0 0.0
    %172 = vmatpush1.msra.mxu0 0.0
    %173 = vmatprep.subr.mxu0 0.0
    %174 = vmatpush1.msra.mxu0 0.0
    %175 = vmatprep.subr.mxu0 0.0
    %176 = vmatpush1.msra.mxu0 0.0
    %177 = vmatprep.subr.mxu0 0.0
    %178 = vmatpush1.msra.mxu0 0.0
    %179 = vmatprep.subr.mxu0 0.0
    %180 = vmatpush1.msra.mxu0 0.0
    %181 = vmatprep.subr.mxu0 0.0
    %182 = vmatpush1.msra.mxu0 0.0
    %183 = vmatprep.subr.mxu0 0.0
    %184 = vmatpush1.msra.mxu0 0.0
    %185 = vmatprep.subr.mxu0 0.0
    %186 = vmatpush1.msra.mxu0 0.0
    %187 = vmatprep.subr.mxu0 0.0
    %188 = vmatpush1.msra.mxu0 0.0
    %189 = vmatprep.subr.mxu0 0.0
    %190 = vmatpush1.msra.mxu0 %v120
    %191 = vmatprep.subr.mxu0 0.0
    %192 = vmatpush2.msra.mxu0 0.0
    %193 = vmatprep.subr.mxu0 0.0
    %194 = vmatpush2.msra.mxu0 0.0
    %195 = vmatprep.subr.mxu0 0.0
    %196 = vmatpush2.msra.mxu0 0.0
    %197 = vmatprep.subr.mxu0 0.0
    %198 = vmatpush2.msra.mxu0 0.0
    %199 = vmatprep.subr.mxu0 0.0
    %200 = vmatpush2.msra.mxu0 0.0
    %201 = vmatprep.subr.mxu0 0.0
    %202 = vmatpush2.msra.mxu0 0.0
    %203 = vmatprep.subr.mxu0 0.0
    %204 = vmatpush2.msra.mxu0 0.0
    %205 = vmatprep.subr.mxu0 0.0
    %206 = vmatpush2.msra.mxu0 0.0
    %207 = vmatprep.subr.mxu0 0.0
    %208 = vmatpush2.msra.mxu0 0.0
    %209 = vmatprep.subr.mxu0 0.0
    %210 = vmatpush2.msra.mxu0 0.0
    %211 = vmatprep.subr.mxu0 0.0
    %212 = vmatpush2.msra.mxu0 0.0
    %213 = vmatprep.subr.mxu0 0.0
    %214 = vmatpush2.msra.mxu0 0.0
    %215 = vmatprep.subr.mxu0 0.0
    %216 = vmatpush2.msra.mxu0 0.0
    %217 = vmatprep.subr.mxu0 0.0
    %218 = vmatpush2.msra.mxu0 0.0
    %219 = vmatprep.subr.mxu0 0.0
    %220 = vmatpush2.msra.mxu0 0.0
    %221 = vmatprep.subr.mxu0 0.0
    %222 = vmatpush2.msra.mxu0 0.0
    %223 = vmatprep.mubr.f32.mxu0 0.0
    %224 = vmatmul.mubr.f32.gmra.mxu0 %v154
    %v225 = vpop.f32.mrf.mxu0
    %v226 = vadd.f32 0.0, %v225
    %v227 = vpop.f32.mrf.mxu0
    %228 = vmatprep.mubr.f32.mxu0 0.0
    %229 = vmatmul.mubr.f32.gmra.mxu0 %v157
    %v230 = vpop.f32.mrf.mxu0
    %v231 = vadd.f32 0.0, %v230
    %v232 = vpop.f32.mrf.mxu0
    %233 = vdwg.mxu0
    %v235 = vsel %vm152, %v121, 0
    %v238 = vsel %vm152, %v122, 0
    %240 = vmatprep.subr.mxu0 0.0
    %241 = vmatpush1.msra.mxu0 0.0
    %242 = vmatprep.subr.mxu0 0.0
    %243 = vmatpush1.msra.mxu0 0.0
    %244 = vmatprep.subr.mxu0 0.0
    %245 = vmatpush1.msra.mxu0 0.0
    %246 = vmatprep.subr.mxu0 0.0
    %247 = vmatpush1.msra.mxu0 0.0
    %248 = vmatprep.subr.mxu0 0.0
    %249 = vmatpush1.msra.mxu0 0.0
    %250 = vmatprep.subr.mxu0 0.0
    %251 = vmatpush1.msra.mxu0 0.0
    %252 = vmatprep.subr.mxu0 0.0
    %253 = vmatpush1.msra.mxu0 0.0
    %254 = vmatprep.subr.mxu0 0.0
    %255 = vmatpush1.msra.mxu0 0.0
    %256 = vmatprep.subr.mxu0 0.0
    %257 = vmatpush1.msra.mxu0 0.0
    %258 = vmatprep.subr.mxu0 0.0
    %259 = vmatpush1.msra.mxu0 0.0
    %260 = vmatprep.subr.mxu0 0.0
    %261 = vmatpush1.msra.mxu0 0.0
    %262 = vmatprep.subr.mxu0 0.0
    %263 = vmatpush1.msra.mxu0 0.0
    %264 = vmatprep.subr.mxu0 0.0
    %265 = vmatpush1.msra.mxu0 0.0
    %266 = vmatprep.subr.mxu0 0.0
    %267 = vmatpush1.msra.mxu0 0.0
    %268 = vmatprep.subr.mxu0 0.0
    %269 = vmatpush1.msra.mxu0 0.0
    %270 = vmatprep.subr.mxu0 0.0
    %271 = vmatpush1.msra.mxu0 %v140
    %272 = vmatprep.subr.mxu0 0.0
    %273 = vmatpush2.msra.mxu0 0.0
    %274 = vmatprep.subr.mxu0 0.0
    %275 = vmatpush2.msra.mxu0 0.0
    %276 = vmatprep.subr.mxu0 0.0
    %277 = vmatpush2.msra.mxu0 0.0
    %278 = vmatprep.subr.mxu0 0.0
    %279 = vmatpush2.msra.mxu0 0.0
    %280 = vmatprep.subr.mxu0 0.0
    %281 = vmatpush2.msra.mxu0 0.0
    %282 = vmatprep.subr.mxu0 0.0
    %283 = vmatpush2.msra.mxu0 0.0
    %284 = vmatprep.subr.mxu0 0.0
    %285 = vmatpush2.msra.mxu0 0.0
    %286 = vmatprep.subr.mxu0 0.0
    %287 = vmatpush2.msra.mxu0 0.0
    %288 = vmatprep.subr.mxu0 0.0
    %289 = vmatpush2.msra.mxu0 0.0
    %290 = vmatprep.subr.mxu0 0.0
    %291 = vmatpush2.msra.mxu0 0.0
    %292 = vmatprep.subr.mxu0 0.0
    %293 = vmatpush2.msra.mxu0 0.0
    %294 = vmatprep.subr.mxu0 0.0
    %295 = vmatpush2.msra.mxu0 0.0
    %296 = vmatprep.subr.mxu0 0.0
    %297 = vmatpush2.msra.mxu0 0.0
    %298 = vmatprep.subr.mxu0 0.0
    %299 = vmatpush2.msra.mxu0 0.0
    %300 = vmatprep.subr.mxu0 0.0
    %301 = vmatpush2.msra.mxu0 0.0
    %302 = vmatprep.subr.mxu0 0.0
    %303 = vmatpush2.msra.mxu0 0.0
    %304 = vmatprep.mubr.f32.mxu0 0.0
    %305 = vmatmul.mubr.f32.gmra.mxu0 %v235
    %v306 = vpop.f32.mrf.mxu0
    %v307 = vadd.f32 %v226, %v306
    %v308 = vpop.f32.mrf.mxu0
    %309 = vmatprep.mubr.f32.mxu0 0.0
    %310 = vmatmul.mubr.f32.gmra.mxu0 %v238
    %v311 = vpop.f32.mrf.mxu0
    %v312 = vadd.f32 %v231, %v311
    %v313 = vpop.f32.mrf.mxu0
    %314 = vdwg.mxu0
    %v316 = vsel %vm152, %v125, 0
    %v319 = vsel %vm152, %v126, 0
    %321 = vmatprep.subr.mxu0 0.0
    %322 = vmatpush1.msra.mxu0 0.0
    %323 = vmatprep.subr.mxu0 0.0
    %324 = vmatpush1.msra.mxu0 0.0
    %325 = vmatprep.subr.mxu0 0.0
    %326 = vmatpush1.msra.mxu0 0.0
    %327 = vmatprep.subr.mxu0 0.0
    %328 = vmatpush1.msra.mxu0 0.0
    %329 = vmatprep.subr.mxu0 0.0
    %330 = vmatpush1.msra.mxu0 0.0
    %331 = vmatprep.subr.mxu0 0.0
    %332 = vmatpush1.msra.mxu0 0.0
    %333 = vmatprep.subr.mxu0 0.0
    %334 = vmatpush1.msra.mxu0 0.0
    %335 = vmatprep.subr.mxu0 0.0
    %336 = vmatpush1.msra.mxu0 0.0
    %337 = vmatprep.subr.mxu0 0.0
    %338 = vmatpush1.msra.mxu0 0.0
    %339 = vmatprep.subr.mxu0 0.0
    %340 = vmatpush1.msra.mxu0 0.0
    %341 = vmatprep.subr.mxu0 0.0
    %342 = vmatpush1.msra.mxu0 0.0
    %343 = vmatprep.subr.mxu0 0.0
    %344 = vmatpush1.msra.mxu0 0.0
    %345 = vmatprep.subr.mxu0 0.0
    %346 = vmatpush1.msra.mxu0 0.0
    %347 = vmatprep.subr.mxu0 0.0
    %348 = vmatpush1.msra.mxu0 0.0
    %349 = vmatprep.subr.mxu0 0.0
    %350 = vmatpush1.msra.mxu0 0.0
    %351 = vmatprep.subr.mxu0 0.0
    %352 = vmatpush1.msra.mxu0 %v151
    %353 = vmatprep.subr.mxu0 0.0
    %354 = vmatpush2.msra.mxu0 0.0
    %355 = vmatprep.subr.mxu0 0.0
    %356 = vmatpush2.msra.mxu0 0.0
    %357 = vmatprep.subr.mxu0 0.0
    %358 = vmatpush2.msra.mxu0 0.0
    %359 = vmatprep.subr.mxu0 0.0
    %360 = vmatpush2.msra.mxu0 0.0
    %361 = vmatprep.subr.mxu0 0.0
    %362 = vmatpush2.msra.mxu0 0.0
    %363 = vmatprep.subr.mxu0 0.0
    %364 = vmatpush2.msra.mxu0 0.0
    %365 = vmatprep.subr.mxu0 0.0
    %366 = vmatpush2.msra.mxu0 0.0
    %367 = vmatprep.subr.mxu0 0.0
    %368 = vmatpush2.msra.mxu0 0.0
    %369 = vmatprep.subr.mxu0 0.0
    %370 = vmatpush2.msra.mxu0 0.0
    %371 = vmatprep.subr.mxu0 0.0
    %372 = vmatpush2.msra.mxu0 0.0
    %373 = vmatprep.subr.mxu0 0.0
    %374 = vmatpush2.msra.mxu0 0.0
    %375 = vmatprep.subr.mxu0 0.0
    %376 = vmatpush2.msra.mxu0 0.0
    %377 = vmatprep.subr.mxu0 0.0
    %378 = vmatpush2.msra.mxu0 0.0
    %379 = vmatprep.subr.mxu0 0.0
    %380 = vmatpush2.msra.mxu0 0.0
    %381 = vmatprep.subr.mxu0 0.0
    %382 = vmatpush2.msra.mxu0 0.0
    %383 = vmatprep.subr.mxu0 0.0
    %384 = vmatpush2.msra.mxu0 0.0
    %385 = vmatprep.mubr.f32.mxu0 0.0
    %386 = vmatmul.mubr.f32.gmra.mxu0 %v316
    %v387 = vpop.f32.mrf.mxu0
    %v388 = vadd.f32 0.0, %v387
    %v389 = vpop.f32.mrf.mxu0
    %390 = vmatprep.mubr.f32.mxu0 0.0
    %391 = vmatmul.mubr.f32.gmra.mxu0 %v319
    %v392 = vpop.f32.mrf.mxu0
    %v393 = vadd.f32 0.0, %v392
    %v394 = vpop.f32.mrf.mxu0
    %395 = vdwg.mxu0
    %v396 = vadd.f32 %v307, %v388
    %v397 = vadd.f32 %v312, %v393
    %399 = vset.pattern.permute.xlu0 0
    %400 = vperm.xlu0 %399, %v127
    %v401 = vpop.permute.xlu0 %400
    %404 = vset.pattern.permute.xlu0 0
    %405 = vperm.xlu0 %404, %v128
    %v406 = vpop.permute.xlu0 %405
    %v408 = vadd.f32 %v396, %v401
    %v409 = vadd.f32 %v397, %v406
    %v410 = vld [vmem:[%s9] sm:$0x1]
    %v411 = vld [vmem:[%s10] sm:$0x1]
    %v412 = vld [vmem:[%s11] sm:$0x1]
    %v413 = vld [vmem:[#allocation2] sm:$0x1]
    %416 = vrot.lane.b32.xlu0 %v408, 1
    %v417 = vpop.permute.xlu0 %416
    %418 = vrot.lane.b32.xlu0 %v409, 1
    %v419 = vpop.permute.xlu0 %418
    %v422 = vsel %vm73, 0.0, %v417
    %v423 = vsel %vm73, 0.0, %v419
    %v424 = vmul.f32 %v422, %v138
    %v425 = vmul.f32 %v423, %v138
    %426 = vrot.lane.b32.xlu0 %v408, 127
    %v427 = vpop.permute.xlu0 %426
    %428 = vrot.lane.b32.xlu0 %v409, 127
    %v429 = vpop.permute.xlu0 %428
    %v432 = vsel %vm79, %v427, 0.0
    %v433 = vsel %vm79, %v429, 0.0
    %v434 = vmul.f32 %v432, %v149
    %v435 = vmul.f32 %v433, %v149
    %vm436 = vcmask 130048
    %v438 = vsel %vm436, %v411, 0
    %440 = vmatprep.subr.mxu0 0.0
    %441 = vmatpush1.msra.mxu0 0.0
    %442 = vmatprep.subr.mxu0 0.0
    %443 = vmatpush1.msra.mxu0 0.0
    %444 = vmatprep.subr.mxu0 0.0
    %445 = vmatpush1.msra.mxu0 0.0
    %446 = vmatprep.subr.mxu0 0.0
    %447 = vmatpush1.msra.mxu0 0.0
    %448 = vmatprep.subr.mxu0 0.0
    %449 = vmatpush1.msra.mxu0 0.0
    %450 = vmatprep.subr.mxu0 0.0
    %451 = vmatpush1.msra.mxu0 0.0
    %452 = vmatprep.subr.mxu0 0.0
    %453 = vmatpush1.msra.mxu0 0.0
    %454 = vmatprep.subr.mxu0 0.0
    %455 = vmatpush1.msra.mxu0 0.0
    %456 = vmatprep.subr.mxu0 0.0
    %457 = vmatpush1.msra.mxu0 0.0
    %458 = vmatprep.subr.mxu0 0.0
    %459 = vmatpush1.msra.mxu0 0.0
    %460 = vmatprep.subr.mxu0 0.0
    %461 = vmatpush1.msra.mxu0 0.0
    %462 = vmatprep.subr.mxu0 0.0
    %463 = vmatpush1.msra.mxu0 0.0
    %464 = vmatprep.subr.mxu0 0.0
    %465 = vmatpush1.msra.mxu0 0.0
    %466 = vmatprep.subr.mxu0 0.0
    %467 = vmatpush1.msra.mxu0 0.0
    %468 = vmatprep.subr.mxu0 0.0
    %469 = vmatpush1.msra.mxu0 %v409
    %470 = vmatprep.subr.mxu0 0.0
    %471 = vmatpush1.msra.mxu0 %v408
    %472 = vmatprep.subr.mxu0 0.0
    %473 = vmatpush2.msra.mxu0 0.0
    %474 = vmatprep.subr.mxu0 0.0
    %475 = vmatpush2.msra.mxu0 0.0
    %476 = vmatprep.subr.mxu0 0.0
    %477 = vmatpush2.msra.mxu0 0.0
    %478 = vmatprep.subr.mxu0 0.0
    %479 = vmatpush2.msra.mxu0 0.0
    %480 = vmatprep.subr.mxu0 0.0
    %481 = vmatpush2.msra.mxu0 0.0
    %482 = vmatprep.subr.mxu0 0.0
    %483 = vmatpush2.msra.mxu0 0.0
    %484 = vmatprep.subr.mxu0 0.0
    %485 = vmatpush2.msra.mxu0 0.0
    %486 = vmatprep.subr.mxu0 0.0
    %487 = vmatpush2.msra.mxu0 0.0
    %488 = vmatprep.subr.mxu0 0.0
    %489 = vmatpush2.msra.mxu0 0.0
    %490 = vmatprep.subr.mxu0 0.0
    %491 = vmatpush2.msra.mxu0 0.0
    %492 = vmatprep.subr.mxu0 0.0
    %493 = vmatpush2.msra.mxu0 0.0
    %494 = vmatprep.subr.mxu0 0.0
    %495 = vmatpush2.msra.mxu0 0.0
    %496 = vmatprep.subr.mxu0 0.0
    %497 = vmatpush2.msra.mxu0 0.0
    %498 = vmatprep.subr.mxu0 0.0
    %499 = vmatpush2.msra.mxu0 0.0
    %500 = vmatprep.subr.mxu0 0.0
    %501 = vmatpush2.msra.mxu0 0.0
    %502 = vmatprep.subr.mxu0 0.0
    %503 = vmatpush2.msra.mxu0 0.0
    %504 = vmatprep.mubr.f32.mxu0 0.0
    %505 = vmatmul.mubr.f32.gmra.mxu0 %v438
    %v506 = vpop.f32.mrf.mxu0
    %v507 = vadd.f32 0.0, %v506
    %v508 = vpop.f32.mrf.mxu0
    %509 = vdwg.mxu0
    %v511 = vsel %vm436, %v410, 0
    %513 = vmatprep.subr.mxu0 0.0
    %514 = vmatpush1.msra.mxu0 0.0
    %515 = vmatprep.subr.mxu0 0.0
    %516 = vmatpush1.msra.mxu0 0.0
    %517 = vmatprep.subr.mxu0 0.0
    %518 = vmatpush1.msra.mxu0 0.0
    %519 = vmatprep.subr.mxu0 0.0
    %520 = vmatpush1.msra.mxu0 0.0
    %521 = vmatprep.subr.mxu0 0.0
    %522 = vmatpush1.msra.mxu0 0.0
    %523 = vmatprep.subr.mxu0 0.0
    %524 = vmatpush1.msra.mxu0 0.0
    %525 = vmatprep.subr.mxu0 0.0
    %526 = vmatpush1.msra.mxu0 0.0
    %527 = vmatprep.subr.mxu0 0.0
    %528 = vmatpush1.msra.mxu0 0.0
    %529 = vmatprep.subr.mxu0 0.0
    %530 = vmatpush1.msra.mxu0 0.0
    %531 = vmatprep.subr.mxu0 0.0
    %532 = vmatpush1.msra.mxu0 0.0
    %533 = vmatprep.subr.mxu0 0.0
    %534 = vmatpush1.msra.mxu0 0.0
    %535 = vmatprep.subr.mxu0 0.0
    %536 = vmatpush1.msra.mxu0 0.0
    %537 = vmatprep.subr.mxu0 0.0
    %538 = vmatpush1.msra.mxu0 0.0
    %539 = vmatprep.subr.mxu0 0.0
    %540 = vmatpush1.msra.mxu0 0.0
    %541 = vmatprep.subr.mxu0 0.0
    %542 = vmatpush1.msra.mxu0 %v425
    %543 = vmatprep.subr.mxu0 0.0
    %544 = vmatpush1.msra.mxu0 %v424
    %545 = vmatprep.subr.mxu0 0.0
    %546 = vmatpush2.msra.mxu0 0.0
    %547 = vmatprep.subr.mxu0 0.0
    %548 = vmatpush2.msra.mxu0 0.0
    %549 = vmatprep.subr.mxu0 0.0
    %550 = vmatpush2.msra.mxu0 0.0
    %551 = vmatprep.subr.mxu0 0.0
    %552 = vmatpush2.msra.mxu0 0.0
    %553 = vmatprep.subr.mxu0 0.0
    %554 = vmatpush2.msra.mxu0 0.0
    %555 = vmatprep.subr.mxu0 0.0
    %556 = vmatpush2.msra.mxu0 0.0
    %557 = vmatprep.subr.mxu0 0.0
    %558 = vmatpush2.msra.mxu0 0.0
    %559 = vmatprep.subr.mxu0 0.0
    %560 = vmatpush2.msra.mxu0 0.0
    %561 = vmatprep.subr.mxu0 0.0
    %562 = vmatpush2.msra.mxu0 0.0
    %563 = vmatprep.subr.mxu0 0.0
    %564 = vmatpush2.msra.mxu0 0.0
    %565 = vmatprep.subr.mxu0 0.0
    %566 = vmatpush2.msra.mxu0 0.0
    %567 = vmatprep.subr.mxu0 0.0
    %568 = vmatpush2.msra.mxu0 0.0
    %569 = vmatprep.subr.mxu0 0.0
    %570 = vmatpush2.msra.mxu0 0.0
    %571 = vmatprep.subr.mxu0 0.0
    %572 = vmatpush2.msra.mxu0 0.0
    %573 = vmatprep.subr.mxu0 0.0
    %574 = vmatpush2.msra.mxu0 0.0
    %575 = vmatprep.subr.mxu0 0.0
    %576 = vmatpush2.msra.mxu0 0.0
    %577 = vmatprep.mubr.f32.mxu0 0.0
    %578 = vmatmul.mubr.f32.gmra.mxu0 %v511
    %v579 = vpop.f32.mrf.mxu0
    %v580 = vadd.f32 %v507, %v579
    %v581 = vpop.f32.mrf.mxu0
    %582 = vdwg.mxu0
    %v584 = vsel %vm436, %v412, 0
    %586 = vmatprep.subr.mxu0 0.0
    %587 = vmatpush1.msra.mxu0 0.0
    %588 = vmatprep.subr.mxu0 0.0
    %589 = vmatpush1.msra.mxu0 0.0
    %590 = vmatprep.subr.mxu0 0.0
    %591 = vmatpush1.msra.mxu0 0.0
    %592 = vmatprep.subr.mxu0 0.0
    %593 = vmatpush1.msra.mxu0 0.0
    %594 = vmatprep.subr.mxu0 0.0
    %595 = vmatpush1.msra.mxu0 0.0
    %596 = vmatprep.subr.mxu0 0.0
    %597 = vmatpush1.msra.mxu0 0.0
    %598 = vmatprep.subr.mxu0 0.0
    %599 = vmatpush1.msra.mxu0 0.0
    %600 = vmatprep.subr.mxu0 0.0
    %601 = vmatpush1.msra.mxu0 0.0
    %602 = vmatprep.subr.mxu0 0.0
    %603 = vmatpush1.msra.mxu0 0.0
    %604 = vmatprep.subr.mxu0 0.0
    %605 = vmatpush1.msra.mxu0 0.0
    %606 = vmatprep.subr.mxu0 0.0
    %607 = vmatpush1.msra.mxu0 0.0
    %608 = vmatprep.subr.mxu0 0.0
    %609 = vmatpush1.msra.mxu0 0.0
    %610 = vmatprep.subr.mxu0 0.0
    %611 = vmatpush1.msra.mxu0 0.0
    %612 = vmatprep.subr.mxu0 0.0
    %613 = vmatpush1.msra.mxu0 0.0
    %614 = vmatprep.subr.mxu0 0.0
    %615 = vmatpush1.msra.mxu0 %v435
    %616 = vmatprep.subr.mxu0 0.0
    %617 = vmatpush1.msra.mxu0 %v434
    %618 = vmatprep.subr.mxu0 0.0
    %619 = vmatpush2.msra.mxu0 0.0
    %620 = vmatprep.subr.mxu0 0.0
    %621 = vmatpush2.msra.mxu0 0.0
    %622 = vmatprep.subr.mxu0 0.0
    %623 = vmatpush2.msra.mxu0 0.0
    %624 = vmatprep.subr.mxu0 0.0
    %625 = vmatpush2.msra.mxu0 0.0
    %626 = vmatprep.subr.mxu0 0.0
    %627 = vmatpush2.msra.mxu0 0.0
    %628 = vmatprep.subr.mxu0 0.0
    %629 = vmatpush2.msra.mxu0 0.0
    %630 = vmatprep.subr.mxu0 0.0
    %631 = vmatpush2.msra.mxu0 0.0
    %632 = vmatprep.subr.mxu0 0.0
    %633 = vmatpush2.msra.mxu0 0.0
    %634 = vmatprep.subr.mxu0 0.0
    %635 = vmatpush2.msra.mxu0 0.0
    %636 = vmatprep.subr.mxu0 0.0
    %637 = vmatpush2.msra.mxu0 0.0
    %638 = vmatprep.subr.mxu0 0.0
    %639 = vmatpush2.msra.mxu0 0.0
    %640 = vmatprep.subr.mxu0 0.0
    %641 = vmatpush2.msra.mxu0 0.0
    %642 = vmatprep.subr.mxu0 0.0
    %643 = vmatpush2.msra.mxu0 0.0
    %644 = vmatprep.subr.mxu0 0.0
    %645 = vmatpush2.msra.mxu0 0.0
    %646 = vmatprep.subr.mxu0 0.0
    %647 = vmatpush2.msra.mxu0 0.0
    %648 = vmatprep.subr.mxu0 0.0
    %649 = vmatpush2.msra.mxu0 0.0
    %650 = vmatprep.mubr.f32.mxu0 0.0
    %651 = vmatmul.mubr.f32.gmra.mxu0 %v584
    %v652 = vpop.f32.mrf.mxu0
    %v653 = vadd.f32 0.0, %v652
    %v654 = vpop.f32.mrf.mxu0
    %655 = vdwg.mxu0
    %v656 = vadd.f32 %v580, %v653
    %658 = vset.pattern.permute.xlu0 0
    %659 = vperm.xlu0 %658, %v413
    %v660 = vpop.permute.xlu0 %659
    %v662 = vlaneseq
    %v663 = vshrl.u32 %v662, 7
    %v664 = vsub.s32 0, %v663
    %v665 = vrot.slane %v660, %v664
    %v666 = vadd.f32 %v656, %v665
    %v667 = vld [vmem:[%s13] sm:$0x3]
    %v668 = vlaneseq
    %v669 = vshrl.u32 %v668, 7
    %v670 = vsub.s32 0, %v669
    %v671 = vrot.slane %v666, %v670
    %v672 = vmul.f32 %v671, %v667
    %v673 = vld [vmem:[%s15] sm:$0xff]
    %v674 = vld [vmem:[%s15 + $0x8] sm:$0xff]
    %v675 = vld [vmem:[%s15 + $0x10] sm:$0xff]
    %v676 = vld [vmem:[%s15 + $0x18] sm:$0xff]
    %v677 = vld [vmem:[%s15 + $0x20] sm:$0xff]
    %v678 = vld [vmem:[%s15 + $0x28] sm:$0xff]
    %v679 = vld [vmem:[%s15 + $0x30] sm:$0xff]
    %v680 = vld [vmem:[%s15 + $0x38] sm:$0xff]
    %v681 = vld [vmem:[%s15 + $0x40] sm:$0xff]
    %v682 = vld [vmem:[%s15 + $0x48] sm:$0xff]
    %v683 = vld [vmem:[%s15 + $0x50] sm:$0xff]
    %v684 = vld [vmem:[%s15 + $0x58] sm:$0xff]
    %v685 = vld [vmem:[%s15 + $0x60] sm:$0xff]
    %v686 = vld [vmem:[%s15 + $0x68] sm:$0xff]
    %v687 = vld [vmem:[%s15 + $0x70] sm:$0xff]
    %v688 = vld [vmem:[%s15 + $0x78] sm:$0xff]
    %v689 = vld [vmem:[%s14] sm:$0x3]
    %691 = vset.pattern.permute.xlu0 0
    %692 = vperm.xlu0 %691, %v689
    %v693 = vpop.permute.xlu0 %692
    %695 = vmatprep.subr.mxu0 0.0
    %696 = vmatpush1.msra.mxu0 %v688
    %697 = vmatprep.subr.mxu0 0.0
    %698 = vmatpush1.msra.mxu0 %v687
    %699 = vmatprep.subr.mxu0 0.0
    %700 = vmatpush1.msra.mxu0 %v686
    %701 = vmatprep.subr.mxu0 0.0
    %702 = vmatpush1.msra.mxu0 %v685
    %703 = vmatprep.subr.mxu0 0.0
    %704 = vmatpush1.msra.mxu0 %v684
    %705 = vmatprep.subr.mxu0 0.0
    %706 = vmatpush1.msra.mxu0 %v683
    %707 = vmatprep.subr.mxu0 0.0
    %708 = vmatpush1.msra.mxu0 %v682
    %709 = vmatprep.subr.mxu0 0.0
    %710 = vmatpush1.msra.mxu0 %v681
    %711 = vmatprep.subr.mxu0 0.0
    %712 = vmatpush1.msra.mxu0 %v680
    %713 = vmatprep.subr.mxu0 0.0
    %714 = vmatpush1.msra.mxu0 %v679
    %715 = vmatprep.subr.mxu0 0.0
    %716 = vmatpush1.msra.mxu0 %v678
    %717 = vmatprep.subr.mxu0 0.0
    %718 = vmatpush1.msra.mxu0 %v677
    %719 = vmatprep.subr.mxu0 0.0
    %720 = vmatpush1.msra.mxu0 %v676
    %721 = vmatprep.subr.mxu0 0.0
    %722 = vmatpush1.msra.mxu0 %v675
    %723 = vmatprep.subr.mxu0 0.0
    %724 = vmatpush1.msra.mxu0 %v674
    %725 = vmatprep.subr.mxu0 0.0
    %726 = vmatpush1.msra.mxu0 %v673
    %727 = vmatprep.subr.mxu0 0.0
    %728 = vmatpush2.msra.mxu0 0.0
    %729 = vmatprep.subr.mxu0 0.0
    %730 = vmatpush2.msra.mxu0 0.0
    %731 = vmatprep.subr.mxu0 0.0
    %732 = vmatpush2.msra.mxu0 0.0
    %733 = vmatprep.subr.mxu0 0.0
    %734 = vmatpush2.msra.mxu0 0.0
    %735 = vmatprep.subr.mxu0 0.0
    %736 = vmatpush2.msra.mxu0 0.0
    %737 = vmatprep.subr.mxu0 0.0
    %738 = vmatpush2.msra.mxu0 0.0
    %739 = vmatprep.subr.mxu0 0.0
    %740 = vmatpush2.msra.mxu0 0.0
    %741 = vmatprep.subr.mxu0 0.0
    %742 = vmatpush2.msra.mxu0 0.0
    %743 = vmatprep.subr.mxu0 0.0
    %744 = vmatpush2.msra.mxu0 0.0
    %745 = vmatprep.subr.mxu0 0.0
    %746 = vmatpush2.msra.mxu0 0.0
    %747 = vmatprep.subr.mxu0 0.0
    %748 = vmatpush2.msra.mxu0 0.0
    %749 = vmatprep.subr.mxu0 0.0
    %750 = vmatpush2.msra.mxu0 0.0
    %751 = vmatprep.subr.mxu0 0.0
    %752 = vmatpush2.msra.mxu0 0.0
    %753 = vmatprep.subr.mxu0 0.0
    %754 = vmatpush2.msra.mxu0 0.0
    %755 = vmatprep.subr.mxu0 0.0
    %756 = vmatpush2.msra.mxu0 0.0
    %757 = vmatprep.subr.mxu0 0.0
    %758 = vmatpush2.msra.mxu0 0.0
    %759 = vmatprep.mubr.f32.mxu0 0.0
    %760 = vmatmul.mubr.f32.gmra.mxu0 %v672
    %v761 = vpop.f32.mrf.mxu0
    %v762 = vadd.f32 %v693, %v761
    %v763 = vpop.f32.mrf.mxu0
    %764 = vdwg.mxu0
    %vm765 = vcmask 9216
    %766 = vst.msk [vmem:[#allocation3] sm:$0x3] %vm765, %v762
    // Predicated region
    $region74: #{tpu_custom_call.1} parent=1 // pred_check
      _
    $region75: #{tpu_custom_call.1} parent=1 // pred_check_branch
      %768 = sbr.rel (0) target = $region77
    $region76: #{tpu_custom_call.1} parent=1 // pred_region
      %s770 = ssub.s32 32, 32
      %771 = vsyncadd [#allocation4], %s770
      %s773 = sshll.u32 [#allocation3], 4
      %s774 = int_to_ptr.vmem [resolvable:$true] %s773
      %776 = dma.vmem_to_hbm [thread:$0]  %s774, 32, %s18, [#allocation4]
    $region77: #{tpu_custom_call.1} parent=1 // pred_fallthru
      _
    // Predicated region
    $region78: #{tpu_custom_call.1} parent=1 // pred_check
      _
    $region79: #{tpu_custom_call.1} parent=1 // pred_check_branch
      %778 = sbr.rel (0) target = $region81
    $region80: #{tpu_custom_call.1} parent=1 // pred_region
      %779 = dma.done [#allocation4], 32
    $region81: #{tpu_custom_call.1} parent=1 // pred_fallthru
      _
    %780 = vsyncpa [#allocation4], 1

</llo_original>
